<compile_context>
chip_gen: v7x
topology: tpu7x:2x2x1
jax: 0.10.0
libtpu: 0.0.40
codegen_flags: <defaults>
</compile_context>

<pallas_src>
import math
from functools import partial

import jax
import jax.numpy as jnp
from jax.experimental import pallas as pl
from jax.experimental.pallas import tpu as pltpu


def _round_up(x, m):
    return ((x + m - 1) // m) * m


def _cdiv(a, b):
    return -(-a // b)


def _vmem_capacity_bytes():
    """Per-core VMEM capacity; falls back to 64 MiB (v7x, the smallest)."""
    try:
        cap = int(pltpu.get_tpu_info().vmem_capacity_bytes)
        if cap > 0:
            return cap
    except Exception:
        pass
    return 64 * 1024 * 1024


def _choose_tiles(N, T, Dp, Hp, x_bytes, out_bytes, w_bytes, vmem_budget):
    """Pick (NB, Np, TC, Tp) so that the live VMEM footprint
       2*x_block + 2*out_block + h_scratch + 2*(Wx+Wh+b)  <=  vmem_budget."""
    Np8 = _round_up(max(N, 1), 8)

    # Wx/Wh/b use constant index maps (fetched once) but are still
    # double-buffered by the pipeline; reserve their VMEM up front.
    weight_bytes = 2 * (Dp * Hp + Hp * Hp + 8 * Hp) * w_bytes
    avail = vmem_budget - weight_bytes

    def per_t(nb):  # bytes per chunk-timestep: double-buffered x & out blocks
        return nb * 2 * (Dp * x_bytes + Hp * out_bytes)

    # Batch block: fill the MXU rows (256 on v6e/v7x; >=128 feeds v5e), but
    # keep >=2 blocks on the parallel axis when the batch is big enough so the
    # second TensorCore on v7x gets work.
    nb_target = 256
    if Np8 >= 2 * 128:
        nb_target = min(nb_target, _round_up(_cdiv(Np8, 2), 8))
    NB = min(nb_target, Np8)
    while NB > 8 and per_t(NB) + NB * Hp * 4 > max(avail, 0):
        NB -= 8
    NB = max(NB, 8)
    # Re-balance so the padded batch splits evenly (minimal wasted rows).
    n_blocks = _cdiv(Np8, NB)
    NB = _round_up(_cdiv(Np8, n_blocks), 8)
    Np = NB * n_blocks

    # Time chunk: as large as the remaining VMEM allows (capped at 64),
    # splitting T evenly so the last chunk is not mostly padding.
    tc_budget = max(int((avail - NB * Hp * 4) // max(per_t(NB), 1)), 1)
    tc_target = max(1, min(tc_budget, 64, T))
    t_chunks = _cdiv(T, tc_target)
    TC = _cdiv(T, t_chunks)
    Tp = TC * t_chunks
    return NB, Np, TC, Tp


def _pad_to(arr, shape):
    pads = [(0, s - d) for d, s in zip(arr.shape, shape)]
    if any(p for _, p in pads):
        arr = jnp.pad(arr, pads)
    return arr


def rnn_kernel(x_ref, h0_ref, wx_ref, wh_ref, b_ref, out_ref, h_scratch):
    """One grid step == one (batch block, T chunk).

    x_ref     : (TC, NB, Dp)  time-major input chunk (possibly bf16)
    h0_ref    : (NB, Hp)      initial hidden state for this batch block
    wx_ref    : (Dp, Hp)      resident (constant index map)
    wh_ref    : (Hp, Hp)      resident
    b_ref     : (1, Hp)       resident, f32
    out_ref   : (TC, NB, Hp)  hidden states for this chunk (also holds xp)
    h_scratch : VMEM (NB, Hp) f32, hidden state carried across T chunks
    """
    TC, NB, Dp = x_ref.shape
    Hp = wh_ref.shape[1]

    # (Re)initialize the carried hidden state at the first T chunk of each
    # batch block.  The T-chunk axis is innermost and "arbitrary"
    # (sequential), so the scratch correctly carries h across chunks.
    @pl.when(pl.program_id(1) == 0)
    def _():
        h_scratch[...] = h0_ref[...].astype(jnp.float32)

    # Hoisted input projection for the whole chunk, written straight into the
    # output block (no separate xp scratch).  Merging the (TC, NB) leading
    # axes is layout-preserving: NB is a multiple of 8, Dp/Hp of 128.
    # NOTE: if out dtype were narrower than f32, xp gets rounded here before
    # the h@Wh add (acceptable drift per review; out is f32 in this module).
    x_flat = x_ref[...].reshape(TC * NB, Dp)
    xp = jnp.dot(x_flat, wx_ref[...], preferred_element_type=jnp.float32)
    xp = xp + b_ref[...].astype(jnp.float32)
    out_ref[...] = xp.reshape(TC, NB, Hp).astype(out_ref.dtype)

    wh = wh_ref[...]

    # Two independent batch sub-chains per step (when NB allows it) let the
    # scheduler overlap one chain's dot with the other's tanh across steps.
    n_sub = 2 if (NB >= 32 and NB % 16 == 0) else 1
    sub = NB // n_sub

    def step(t, carry):
        for j in range(n_sub):
            rows = pl.ds(j * sub, sub)
            h_prev = h_scratch[rows, :]
            pre = out_ref[t, rows, :].astype(jnp.float32) + jnp.dot(
                h_prev.astype(wh.dtype), wh, preferred_element_type=jnp.float32)
            h_new = jnp.tanh(pre)
            out_ref[t, rows, :] = h_new.astype(out_ref.dtype)
            h_scratch[rows, :] = h_new
        return carry

    # Recurrence state lives in VMEM scratch (no giant register carry);
    # partial unroll keeps LLO visibility without blowing compile time.
    jax.lax.fori_loop(0, TC, step, 0, unroll=min(TC, 8))


def rnn_forward_pallas(x, h0, Wx, Wh, b, *, mxu_dtype=jnp.bfloat16,
                       time_major_io=False, batch_block=None, t_chunk=None):
    """x: (N, T, D) (or (T, N, D) if time_major_io), h0: (N, H),
    Wx: (D, H), Wh: (H, H), b: (H,).
    Returns the hidden states for all timesteps, (N, T, H) (or (T, N, H)),
    matching the PyTorch rnn_forward / RNN.forward output.

    mxu_dtype: dtype of the MXU operands (x, Wx, Wh). Default bf16 (~4x MXU
    rate on v6e/v7x, half the weight/x DMA); pass None for exact f32 math."""
    if time_major_io:
        T, N, D = x.shape
        x_tm = x
    else:
        N, T, D = x.shape
        x_tm = jnp.transpose(x, (1, 0, 2))  # (T, N, D)
    H = h0.shape[1]
    out_dtype = h0.dtype

    x_dtype = x.dtype if mxu_dtype is None else jnp.dtype(mxu_dtype)
    w_dtype = Wx.dtype if mxu_dtype is None else jnp.dtype(mxu_dtype)

    # Hardware-friendly padded sizes: lanes (128) for D/H, sublanes (8) for N.
    Dp = _round_up(D, 128)
    Hp = _round_up(H, 128)

    capacity = _vmem_capacity_bytes()
    vmem_budget = int(0.70 * capacity)          # tile-sizing budget
    vmem_limit = int(0.85 * capacity)           # scoped-VMEM limit (headroom)

    NB, Np, TC, Tp = _choose_tiles(
        N, T, Dp, Hp,
        jnp.dtype(x_dtype).itemsize, jnp.dtype(out_dtype).itemsize,
        jnp.dtype(w_dtype).itemsize, vmem_budget)
    if batch_block is not None:
        NB = _round_up(batch_block, 8)
        Np = _round_up(max(N, 1), NB)
    if t_chunk is not None:
        TC = max(1, t_chunk)
        Tp = _round_up(T, TC)

    # Zero-padded, time-major operands.  Zero padding is semantics-preserving:
    # padded hidden/D columns never feed signal back, padded batch rows and
    # timesteps are sliced away at the end.
    x_p = _pad_to(x_tm, (Tp, Np, Dp)).astype(x_dtype)
    h0_p = _pad_to(h0, (Np, Hp))
    Wx_p = _pad_to(Wx, (Dp, Hp)).astype(w_dtype)
    Wh_p = _pad_to(Wh, (Hp, Hp)).astype(w_dtype)
    b_p = _pad_to(b.astype(jnp.float32).reshape(1, -1), (1, Hp))

    grid = (Np // NB, Tp // TC)  # (batch blocks [parallel], T chunks [serial])

    out_tm = pl.pallas_call(
        rnn_kernel,
        out_shape=jax.ShapeDtypeStruct((Tp, Np, Hp), out_dtype),
        grid_spec=pltpu.PrefetchScalarGridSpec(
            num_scalar_prefetch=0,
            grid=grid,
            in_specs=[
                pl.BlockSpec((TC, NB, Dp), lambda n, t: (t, n, 0)),  # x chunk
                pl.BlockSpec((NB, Hp), lambda n, t: (n, 0)),         # h0 block
                pl.BlockSpec((Dp, Hp), lambda n, t: (0, 0)),         # Wx (resident)
                pl.BlockSpec((Hp, Hp), lambda n, t: (0, 0)),         # Wh (resident)
                pl.BlockSpec((1, Hp), lambda n, t: (0, 0)),          # b  (resident)
            ],
            out_specs=pl.BlockSpec((TC, NB, Hp), lambda n, t: (t, n, 0)),
            scratch_shapes=[
                pltpu.VMEM((NB, Hp), jnp.float32),  # carried hidden state
            ],
        ),
        compiler_params=pltpu.CompilerParams(
            # Batch blocks are independent -> parallel (megacore on v7x);
            # the recurrence over T chunks must stay sequential (do NOT swap
            # the grid order, the h_scratch carry relies on it).
            dimension_semantics=("parallel", "arbitrary"),
            vmem_limit_bytes=vmem_limit,
        ),
    )(x_p, h0_p, Wx_p, Wh_p, b_p)

    out_tm = out_tm[:T, :N, :H]
    return out_tm if time_major_io else jnp.transpose(out_tm, (1, 0, 2))


def rnn_forward_ref(x, h0, Wx, Wh, b):
    """Pure-JAX reference reproducing the PyTorch rnn_forward semantics."""
    hi = jax.lax.Precision.HIGHEST

    def step(prev_h, x_t):
        next_h = jnp.tanh(jnp.dot(x_t, Wx, precision=hi)
                          + jnp.dot(prev_h, Wh, precision=hi) + b)
        return next_h, next_h

    _, hs = jax.lax.scan(step, h0, jnp.transpose(x, (1, 0, 2)))
    return jnp.transpose(hs, (1, 0, 2))


if __name__ == "__main__":
    # Small shapes consistent with the module: N=2 sequences, T=8 steps,
    # D=16 input dim, H=32 hidden dim.
    N, T, D, H = 2, 8, 16, 32
    key = jax.random.PRNGKey(0)
    k_x, k_h0, k_wx, k_wh = jax.random.split(key, 4)

    x = jax.random.normal(k_x, (N, T, D), dtype=jnp.float32)
    h0 = jax.random.normal(k_h0, (N, H), dtype=jnp.float32)

    # Deterministic parameter init matching the PyTorch __init__ scheme:
    #   Wx ~ randn(D, H) / sqrt(D), Wh ~ randn(H, H) / sqrt(H), b = 0
    Wx = jax.random.normal(k_wx, (D, H), dtype=jnp.float32) / math.sqrt(D)
    Wh = jax.random.normal(k_wh, (H, H), dtype=jnp.float32) / math.sqrt(H)
    b = jnp.zeros((H,), dtype=jnp.float32)

    hn_ref = rnn_forward_ref(x, h0, Wx, Wh, b)

    # 1) Exact-semantics path (f32 MXU operands): strict check vs reference.
    hn_f32 = jax.jit(partial(rnn_forward_pallas, mxu_dtype=None))(x, h0, Wx, Wh, b)
    hn_f32 = jax.block_until_ready(hn_f32)
    assert hn_f32.shape == (N, T, H)
    assert jnp.allclose(hn_f32, hn_ref, atol=1e-4, rtol=1e-4), \
        "f32 path mismatch vs reference"

    # 2) Default fast path (bf16 MXU operands, f32 accumulate/bias/tanh):
    #    loose check — bf16 recurrence numerics drift slightly over T steps.
    hn_bf16 = jax.jit(rnn_forward_pallas)(x, h0, Wx, Wh, b)
    hn_bf16 = jax.block_until_ready(hn_bf16)
    assert hn_bf16.shape == (N, T, H)
    assert bool(jnp.all(jnp.isfinite(hn_bf16)))
    assert jnp.allclose(hn_bf16, hn_ref, atol=2.5e-1), \
        "bf16-MXU path drifted too far from reference"

    print("KERNEL_OK")
</pallas_src>

<mosaic_0001>
module attributes {stable_mosaic.version = 11 : i64} {
  func.func @rnn_kernel(%arg0: i32, %arg1: i32, %arg2: memref<8x8x128xf32, #tpu.memory_space<vmem>>, %arg3: memref<8x128xf32, #tpu.memory_space<vmem>>, %arg4: memref<128x128xf32, #tpu.memory_space<vmem>>, %arg5: memref<128x128xf32, #tpu.memory_space<vmem>>, %arg6: memref<1x128xf32, #tpu.memory_space<vmem>>, %arg7: memref<8x8x128xf32, #tpu.memory_space<vmem>>, %arg8: memref<8x128xf32, #tpu.memory_space<vmem>>) attributes {dimension_semantics = [#tpu.dimension_semantics<parallel>, #tpu.dimension_semantics<arbitrary>], iteration_bounds = array<i64: 1, 1>, scalar_prefetch = 0 : i64, scratch_operands = 1 : i64, tpu.core_type = #tpu.core_type<tc>, window_params = [{transform_indices = @transform_0, window_bounds = array<i64: 8, 8, 128>}, {transform_indices = @transform_1, window_bounds = array<i64: 8, 128>}, {pipeline_mode = #tpu.pipeline_mode<synchronous>, transform_indices = @transform_2, window_bounds = array<i64: 128, 128>}, {pipeline_mode = #tpu.pipeline_mode<synchronous>, transform_indices = @transform_3, window_bounds = array<i64: 128, 128>}, {pipeline_mode = #tpu.pipeline_mode<synchronous>, transform_indices = @transform_4, window_bounds = array<i64: 1, 128>}, {transform_indices = @transform_5, window_bounds = array<i64: 8, 8, 128>}]} {
    %c0_i32 = arith.constant 0 : i32
    %0 = arith.cmpi eq, %arg1, %c0_i32 : i32
    %1 = arith.extui %0 : i1 to i32
    %c0_i32_0 = arith.constant 0 : i32
    %2 = arith.cmpi ne, %1, %c0_i32_0 : i32
    scf.if %2 {
      %c0_85 = arith.constant 0 : index
      %c0_86 = arith.constant 0 : index
      %109 = vector.load %arg3[%c0_85, %c0_86] : memref<8x128xf32, #tpu.memory_space<vmem>>, vector<8x128xf32>
      %c0_87 = arith.constant 0 : index
      %c0_88 = arith.constant 0 : index
      %110 = vector.load %arg8[%c0_87, %c0_88] : memref<8x128xf32, #tpu.memory_space<vmem>>, vector<8x128xf32>
      tpu.vector_store %arg8[%c0_87, %c0_88], %109 {strides = array<i32>} : memref<8x128xf32, #tpu.memory_space<vmem>>, vector<8x128xf32>,
    } else {
    }
    %c0 = arith.constant 0 : index
    %c0_1 = arith.constant 0 : index
    %c0_2 = arith.constant 0 : index
    %3 = vector.load %arg2[%c0, %c0_1, %c0_2] : memref<8x8x128xf32, #tpu.memory_space<vmem>>, vector<8x8x128xf32>
    %4 = vector.shape_cast %3 : vector<8x8x128xf32> to vector<64x128xf32>
    %c0_3 = arith.constant 0 : index
    %c0_4 = arith.constant 0 : index
    %5 = vector.load %arg4[%c0_3, %c0_4] : memref<128x128xf32, #tpu.memory_space<vmem>>, vector<128x128xf32>
    %cst = arith.constant dense<0.000000e+00> : vector<64x128xf32>
    %6 = tpu.matmul %4, %5, %cst {dimension_numbers = #tpu.dot_dimension_numbers<[1], [0], [0], [1], [0, 0, 1, 1], [], []>} : vector<64x128xf32>, vector<128x128xf32>, vector<64x128xf32> -> vector<64x128xf32>
    %c0_5 = arith.constant 0 : index
    %c0_6 = arith.constant 0 : index
    %7 = vector.load %arg6[%c0_5, %c0_6] : memref<1x128xf32, #tpu.memory_space<vmem>>, vector<1x128xf32>
    %8 = vector.broadcast %7 : vector<1x128xf32> to vector<64x128xf32>
    %9 = arith.addf %6, %8 : vector<64x128xf32>
    %10 = vector.shape_cast %9 : vector<64x128xf32> to vector<8x8x128xf32>
    %c0_7 = arith.constant 0 : index
    %c0_8 = arith.constant 0 : index
    %c0_9 = arith.constant 0 : index
    %11 = vector.load %arg7[%c0_7, %c0_8, %c0_9] : memref<8x8x128xf32, #tpu.memory_space<vmem>>, vector<8x8x128xf32>
    tpu.vector_store %arg7[%c0_7, %c0_8, %c0_9], %10 {strides = array<i32>} : memref<8x8x128xf32, #tpu.memory_space<vmem>>, vector<8x8x128xf32>,
    %c0_10 = arith.constant 0 : index
    %c0_11 = arith.constant 0 : index
    %12 = vector.load %arg5[%c0_10, %c0_11] : memref<128x128xf32, #tpu.memory_space<vmem>>, vector<128x128xf32>
    %c0_i32_12 = arith.constant 0 : i32
    %c0_13 = arith.constant 0 : index
    %c0_14 = arith.constant 0 : index
    %13 = vector.load %arg8[%c0_13, %c0_14] : memref<8x128xf32, #tpu.memory_space<vmem>>, vector<8x128xf32>
    %14 = arith.index_cast %c0_i32_12 : i32 to index
    %c0_15 = arith.constant 0 : index
    %c0_16 = arith.constant 0 : index
    %15 = vector.load %arg7[%14, %c0_15, %c0_16] : memref<8x8x128xf32, #tpu.memory_space<vmem>>, vector<1x8x128xf32>
    %16 = vector.shape_cast %15 : vector<1x8x128xf32> to vector<8x128xf32>
    %cst_17 = arith.constant dense<0.000000e+00> : vector<8x128xf32>
    %17 = tpu.matmul %13, %12, %cst_17 {dimension_numbers = #tpu.dot_dimension_numbers<[1], [0], [0], [1], [0, 0, 1, 1], [], []>} : vector<8x128xf32>, vector<128x128xf32>, vector<8x128xf32> -> vector<8x128xf32>
    %18 = arith.addf %16, %17 : vector<8x128xf32>
    %19 = math.tanh %18 : vector<8x128xf32>
    %20 = arith.index_cast %c0_i32_12 : i32 to index
    %c0_18 = arith.constant 0 : index
    %c0_19 = arith.constant 0 : index
    %21 = vector.load %arg7[%20, %c0_18, %c0_19] : memref<8x8x128xf32, #tpu.memory_space<vmem>>, vector<1x8x128xf32>
    %22 = vector.shape_cast %21 : vector<1x8x128xf32> to vector<8x128xf32>
    %23 = vector.shape_cast %19 : vector<8x128xf32> to vector<1x8x128xf32>
    tpu.vector_store %arg7[%20, %c0_18, %c0_19], %23 {strides = array<i32>} : memref<8x8x128xf32, #tpu.memory_space<vmem>>, vector<1x8x128xf32>,
    %c0_20 = arith.constant 0 : index
    %c0_21 = arith.constant 0 : index
    %24 = vector.load %arg8[%c0_20, %c0_21] : memref<8x128xf32, #tpu.memory_space<vmem>>, vector<8x128xf32>
    tpu.vector_store %arg8[%c0_20, %c0_21], %19 {strides = array<i32>} : memref<8x128xf32, #tpu.memory_space<vmem>>, vector<8x128xf32>,
    %c1_i32 = arith.constant 1 : i32
    %c0_22 = arith.constant 0 : index
    %c0_23 = arith.constant 0 : index
    %25 = vector.load %arg8[%c0_22, %c0_23] : memref<8x128xf32, #tpu.memory_space<vmem>>, vector<8x128xf32>
    %26 = arith.index_cast %c1_i32 : i32 to index
    %c0_24 = arith.constant 0 : index
    %c0_25 = arith.constant 0 : index
    %27 = vector.load %arg7[%26, %c0_24, %c0_25] : memref<8x8x128xf32, #tpu.memory_space<vmem>>, vector<1x8x128xf32>
    %28 = vector.shape_cast %27 : vector<1x8x128xf32> to vector<8x128xf32>
    %cst_26 = arith.constant dense<0.000000e+00> : vector<8x128xf32>
    %29 = tpu.matmul %25, %12, %cst_26 {dimension_numbers = #tpu.dot_dimension_numbers<[1], [0], [0], [1], [0, 0, 1, 1], [], []>} : vector<8x128xf32>, vector<128x128xf32>, vector<8x128xf32> -> vector<8x128xf32>
    %30 = arith.addf %28, %29 : vector<8x128xf32>
    %31 = math.tanh %30 : vector<8x128xf32>
    %32 = arith.index_cast %c1_i32 : i32 to index
    %c0_27 = arith.constant 0 : index
    %c0_28 = arith.constant 0 : index
    %33 = vector.load %arg7[%32, %c0_27, %c0_28] : memref<8x8x128xf32, #tpu.memory_space<vmem>>, vector<1x8x128xf32>
    %34 = vector.shape_cast %33 : vector<1x8x128xf32> to vector<8x128xf32>
    %35 = vector.shape_cast %31 : vector<8x128xf32> to vector<1x8x128xf32>
    tpu.vector_store %arg7[%32, %c0_27, %c0_28], %35 {strides = array<i32>} : memref<8x8x128xf32, #tpu.memory_space<vmem>>, vector<1x8x128xf32>,
    %c0_29 = arith.constant 0 : index
    %c0_30 = arith.constant 0 : index
    %36 = vector.load %arg8[%c0_29, %c0_30] : memref<8x128xf32, #tpu.memory_space<vmem>>, vector<8x128xf32>
    tpu.vector_store %arg8[%c0_29, %c0_30], %31 {strides = array<i32>} : memref<8x128xf32, #tpu.memory_space<vmem>>, vector<8x128xf32>,
    %c2_i32 = arith.constant 2 : i32
    %c0_31 = arith.constant 0 : index
    %c0_32 = arith.constant 0 : index
    %37 = vector.load %arg8[%c0_31, %c0_32] : memref<8x128xf32, #tpu.memory_space<vmem>>, vector<8x128xf32>
    %38 = arith.index_cast %c2_i32 : i32 to index
    %c0_33 = arith.constant 0 : index
    %c0_34 = arith.constant 0 : index
    %39 = vector.load %arg7[%38, %c0_33, %c0_34] : memref<8x8x128xf32, #tpu.memory_space<vmem>>, vector<1x8x128xf32>
    %40 = vector.shape_cast %39 : vector<1x8x128xf32> to vector<8x128xf32>
    %cst_35 = arith.constant dense<0.000000e+00> : vector<8x128xf32>
    %41 = tpu.matmul %37, %12, %cst_35 {dimension_numbers = #tpu.dot_dimension_numbers<[1], [0], [0], [1], [0, 0, 1, 1], [], []>} : vector<8x128xf32>, vector<128x128xf32>, vector<8x128xf32> -> vector<8x128xf32>
    %42 = arith.addf %40, %41 : vector<8x128xf32>
    %43 = math.tanh %42 : vector<8x128xf32>
    %44 = arith.index_cast %c2_i32 : i32 to index
    %c0_36 = arith.constant 0 : index
    %c0_37 = arith.constant 0 : index
    %45 = vector.load %arg7[%44, %c0_36, %c0_37] : memref<8x8x128xf32, #tpu.memory_space<vmem>>, vector<1x8x128xf32>
    %46 = vector.shape_cast %45 : vector<1x8x128xf32> to vector<8x128xf32>
    %47 = vector.shape_cast %43 : vector<8x128xf32> to vector<1x8x128xf32>
    tpu.vector_store %arg7[%44, %c0_36, %c0_37], %47 {strides = array<i32>} : memref<8x8x128xf32, #tpu.memory_space<vmem>>, vector<1x8x128xf32>,
    %c0_38 = arith.constant 0 : index
    %c0_39 = arith.constant 0 : index
    %48 = vector.load %arg8[%c0_38, %c0_39] : memref<8x128xf32, #tpu.memory_space<vmem>>, vector<8x128xf32>
    tpu.vector_store %arg8[%c0_38, %c0_39], %43 {strides = array<i32>} : memref<8x128xf32, #tpu.memory_space<vmem>>, vector<8x128xf32>,
    %c3_i32 = arith.constant 3 : i32
    %c0_40 = arith.constant 0 : index
    %c0_41 = arith.constant 0 : index
    %49 = vector.load %arg8[%c0_40, %c0_41] : memref<8x128xf32, #tpu.memory_space<vmem>>, vector<8x128xf32>
    %50 = arith.index_cast %c3_i32 : i32 to index
    %c0_42 = arith.constant 0 : index
    %c0_43 = arith.constant 0 : index
    %51 = vector.load %arg7[%50, %c0_42, %c0_43] : memref<8x8x128xf32, #tpu.memory_space<vmem>>, vector<1x8x128xf32>
    %52 = vector.shape_cast %51 : vector<1x8x128xf32> to vector<8x128xf32>
    %cst_44 = arith.constant dense<0.000000e+00> : vector<8x128xf32>
    %53 = tpu.matmul %49, %12, %cst_44 {dimension_numbers = #tpu.dot_dimension_numbers<[1], [0], [0], [1], [0, 0, 1, 1], [], []>} : vector<8x128xf32>, vector<128x128xf32>, vector<8x128xf32> -> vector<8x128xf32>
    %54 = arith.addf %52, %53 : vector<8x128xf32>
    %55 = math.tanh %54 : vector<8x128xf32>
    %56 = arith.index_cast %c3_i32 : i32 to index
    %c0_45 = arith.constant 0 : index
    %c0_46 = arith.constant 0 : index
    %57 = vector.load %arg7[%56, %c0_45, %c0_46] : memref<8x8x128xf32, #tpu.memory_space<vmem>>, vector<1x8x128xf32>
    %58 = vector.shape_cast %57 : vector<1x8x128xf32> to vector<8x128xf32>
    %59 = vector.shape_cast %55 : vector<8x128xf32> to vector<1x8x128xf32>
    tpu.vector_store %arg7[%56, %c0_45, %c0_46], %59 {strides = array<i32>} : memref<8x8x128xf32, #tpu.memory_space<vmem>>, vector<1x8x128xf32>,
    %c0_47 = arith.constant 0 : index
    %c0_48 = arith.constant 0 : index
    %60 = vector.load %arg8[%c0_47, %c0_48] : memref<8x128xf32, #tpu.memory_space<vmem>>, vector<8x128xf32>
    tpu.vector_store %arg8[%c0_47, %c0_48], %55 {strides = array<i32>} : memref<8x128xf32, #tpu.memory_space<vmem>>, vector<8x128xf32>,
    %c4_i32 = arith.constant 4 : i32
    %c0_49 = arith.constant 0 : index
    %c0_50 = arith.constant 0 : index
    %61 = vector.load %arg8[%c0_49, %c0_50] : memref<8x128xf32, #tpu.memory_space<vmem>>, vector<8x128xf32>
    %62 = arith.index_cast %c4_i32 : i32 to index
    %c0_51 = arith.constant 0 : index
    %c0_52 = arith.constant 0 : index
    %63 = vector.load %arg7[%62, %c0_51, %c0_52] : memref<8x8x128xf32, #tpu.memory_space<vmem>>, vector<1x8x128xf32>
    %64 = vector.shape_cast %63 : vector<1x8x128xf32> to vector<8x128xf32>
    %cst_53 = arith.constant dense<0.000000e+00> : vector<8x128xf32>
    %65 = tpu.matmul %61, %12, %cst_53 {dimension_numbers = #tpu.dot_dimension_numbers<[1], [0], [0], [1], [0, 0, 1, 1], [], []>} : vector<8x128xf32>, vector<128x128xf32>, vector<8x128xf32> -> vector<8x128xf32>
    %66 = arith.addf %64, %65 : vector<8x128xf32>
    %67 = math.tanh %66 : vector<8x128xf32>
    %68 = arith.index_cast %c4_i32 : i32 to index
    %c0_54 = arith.constant 0 : index
    %c0_55 = arith.constant 0 : index
    %69 = vector.load %arg7[%68, %c0_54, %c0_55] : memref<8x8x128xf32, #tpu.memory_space<vmem>>, vector<1x8x128xf32>
    %70 = vector.shape_cast %69 : vector<1x8x128xf32> to vector<8x128xf32>
    %71 = vector.shape_cast %67 : vector<8x128xf32> to vector<1x8x128xf32>
    tpu.vector_store %arg7[%68, %c0_54, %c0_55], %71 {strides = array<i32>} : memref<8x8x128xf32, #tpu.memory_space<vmem>>, vector<1x8x128xf32>,
    %c0_56 = arith.constant 0 : index
    %c0_57 = arith.constant 0 : index
    %72 = vector.load %arg8[%c0_56, %c0_57] : memref<8x128xf32, #tpu.memory_space<vmem>>, vector<8x128xf32>
    tpu.vector_store %arg8[%c0_56, %c0_57], %67 {strides = array<i32>} : memref<8x128xf32, #tpu.memory_space<vmem>>, vector<8x128xf32>,
    %c5_i32 = arith.constant 5 : i32
    %c0_58 = arith.constant 0 : index
    %c0_59 = arith.constant 0 : index
    %73 = vector.load %arg8[%c0_58, %c0_59] : memref<8x128xf32, #tpu.memory_space<vmem>>, vector<8x128xf32>
    %74 = arith.index_cast %c5_i32 : i32 to index
    %c0_60 = arith.constant 0 : index
    %c0_61 = arith.constant 0 : index
    %75 = vector.load %arg7[%74, %c0_60, %c0_61] : memref<8x8x128xf32, #tpu.memory_space<vmem>>, vector<1x8x128xf32>
    %76 = vector.shape_cast %75 : vector<1x8x128xf32> to vector<8x128xf32>
    %cst_62 = arith.constant dense<0.000000e+00> : vector<8x128xf32>
    %77 = tpu.matmul %73, %12, %cst_62 {dimension_numbers = #tpu.dot_dimension_numbers<[1], [0], [0], [1], [0, 0, 1, 1], [], []>} : vector<8x128xf32>, vector<128x128xf32>, vector<8x128xf32> -> vector<8x128xf32>
    %78 = arith.addf %76, %77 : vector<8x128xf32>
    %79 = math.tanh %78 : vector<8x128xf32>
    %80 = arith.index_cast %c5_i32 : i32 to index
    %c0_63 = arith.constant 0 : index
    %c0_64 = arith.constant 0 : index
    %81 = vector.load %arg7[%80, %c0_63, %c0_64] : memref<8x8x128xf32, #tpu.memory_space<vmem>>, vector<1x8x128xf32>
    %82 = vector.shape_cast %81 : vector<1x8x128xf32> to vector<8x128xf32>
    %83 = vector.shape_cast %79 : vector<8x128xf32> to vector<1x8x128xf32>
    tpu.vector_store %arg7[%80, %c0_63, %c0_64], %83 {strides = array<i32>} : memref<8x8x128xf32, #tpu.memory_space<vmem>>, vector<1x8x128xf32>,
    %c0_65 = arith.constant 0 : index
    %c0_66 = arith.constant 0 : index
    %84 = vector.load %arg8[%c0_65, %c0_66] : memref<8x128xf32, #tpu.memory_space<vmem>>, vector<8x128xf32>
    tpu.vector_store %arg8[%c0_65, %c0_66], %79 {strides = array<i32>} : memref<8x128xf32, #tpu.memory_space<vmem>>, vector<8x128xf32>,
    %c6_i32 = arith.constant 6 : i32
    %c0_67 = arith.constant 0 : index
    %c0_68 = arith.constant 0 : index
    %85 = vector.load %arg8[%c0_67, %c0_68] : memref<8x128xf32, #tpu.memory_space<vmem>>, vector<8x128xf32>
    %86 = arith.index_cast %c6_i32 : i32 to index
    %c0_69 = arith.constant 0 : index
    %c0_70 = arith.constant 0 : index
    %87 = vector.load %arg7[%86, %c0_69, %c0_70] : memref<8x8x128xf32, #tpu.memory_space<vmem>>, vector<1x8x128xf32>
    %88 = vector.shape_cast %87 : vector<1x8x128xf32> to vector<8x128xf32>
    %cst_71 = arith.constant dense<0.000000e+00> : vector<8x128xf32>
    %89 = tpu.matmul %85, %12, %cst_71 {dimension_numbers = #tpu.dot_dimension_numbers<[1], [0], [0], [1], [0, 0, 1, 1], [], []>} : vector<8x128xf32>, vector<128x128xf32>, vector<8x128xf32> -> vector<8x128xf32>
    %90 = arith.addf %88, %89 : vector<8x128xf32>
    %91 = math.tanh %90 : vector<8x128xf32>
    %92 = arith.index_cast %c6_i32 : i32 to index
    %c0_72 = arith.constant 0 : index
    %c0_73 = arith.constant 0 : index
    %93 = vector.load %arg7[%92, %c0_72, %c0_73] : memref<8x8x128xf32, #tpu.memory_space<vmem>>, vector<1x8x128xf32>
    %94 = vector.shape_cast %93 : vector<1x8x128xf32> to vector<8x128xf32>
    %95 = vector.shape_cast %91 : vector<8x128xf32> to vector<1x8x128xf32>
    tpu.vector_store %arg7[%92, %c0_72, %c0_73], %95 {strides = array<i32>} : memref<8x8x128xf32, #tpu.memory_space<vmem>>, vector<1x8x128xf32>,
    %c0_74 = arith.constant 0 : index
    %c0_75 = arith.constant 0 : index
    %96 = vector.load %arg8[%c0_74, %c0_75] : memref<8x128xf32, #tpu.memory_space<vmem>>, vector<8x128xf32>
    tpu.vector_store %arg8[%c0_74, %c0_75], %91 {strides = array<i32>} : memref<8x128xf32, #tpu.memory_space<vmem>>, vector<8x128xf32>,
    %c7_i32 = arith.constant 7 : i32
    %c0_76 = arith.constant 0 : index
    %c0_77 = arith.constant 0 : index
    %97 = vector.load %arg8[%c0_76, %c0_77] : memref<8x128xf32, #tpu.memory_space<vmem>>, vector<8x128xf32>
    %98 = arith.index_cast %c7_i32 : i32 to index
    %c0_78 = arith.constant 0 : index
    %c0_79 = arith.constant 0 : index
    %99 = vector.load %arg7[%98, %c0_78, %c0_79] : memref<8x8x128xf32, #tpu.memory_space<vmem>>, vector<1x8x128xf32>
    %100 = vector.shape_cast %99 : vector<1x8x128xf32> to vector<8x128xf32>
    %cst_80 = arith.constant dense<0.000000e+00> : vector<8x128xf32>
    %101 = tpu.matmul %97, %12, %cst_80 {dimension_numbers = #tpu.dot_dimension_numbers<[1], [0], [0], [1], [0, 0, 1, 1], [], []>} : vector<8x128xf32>, vector<128x128xf32>, vector<8x128xf32> -> vector<8x128xf32>
    %102 = arith.addf %100, %101 : vector<8x128xf32>
    %103 = math.tanh %102 : vector<8x128xf32>
    %104 = arith.index_cast %c7_i32 : i32 to index
    %c0_81 = arith.constant 0 : index
    %c0_82 = arith.constant 0 : index
    %105 = vector.load %arg7[%104, %c0_81, %c0_82] : memref<8x8x128xf32, #tpu.memory_space<vmem>>, vector<1x8x128xf32>
    %106 = vector.shape_cast %105 : vector<1x8x128xf32> to vector<8x128xf32>
    %107 = vector.shape_cast %103 : vector<8x128xf32> to vector<1x8x128xf32>
    tpu.vector_store %arg7[%104, %c0_81, %c0_82], %107 {strides = array<i32>} : memref<8x8x128xf32, #tpu.memory_space<vmem>>, vector<1x8x128xf32>,
    %c0_83 = arith.constant 0 : index
    %c0_84 = arith.constant 0 : index
    %108 = vector.load %arg8[%c0_83, %c0_84] : memref<8x128xf32, #tpu.memory_space<vmem>>, vector<8x128xf32>
    tpu.vector_store %arg8[%c0_83, %c0_84], %103 {strides = array<i32>} : memref<8x128xf32, #tpu.memory_space<vmem>>, vector<8x128xf32>,
    %c8_i32 = arith.constant 8 : i32
    return
  }
  func.func @transform_0(%arg0: i32, %arg1: i32) -> (i32, i32, i32) {
    %c0_i32 = arith.constant 0 : i32
    %c0_i32_0 = arith.constant 0 : i32
    return %arg1, %arg0, %c0_i32 : i32, i32, i32
  }
  func.func @transform_1(%arg0: i32, %arg1: i32) -> (i32, i32) {
    %c0_i32 = arith.constant 0 : i32
    %c0_i32_0 = arith.constant 0 : i32
    return %arg0, %c0_i32 : i32, i32
  }
  func.func @transform_2(%arg0: i32, %arg1: i32) -> (i32, i32) {
    %c0_i32 = arith.constant 0 : i32
    %c0_i32_0 = arith.constant 0 : i32
    %c0_i32_1 = arith.constant 0 : i32
    return %c0_i32, %c0_i32_0 : i32, i32
  }
  func.func @transform_3(%arg0: i32, %arg1: i32) -> (i32, i32) {
    %c0_i32 = arith.constant 0 : i32
    %c0_i32_0 = arith.constant 0 : i32
    %c0_i32_1 = arith.constant 0 : i32
    return %c0_i32, %c0_i32_0 : i32, i32
  }
  func.func @transform_4(%arg0: i32, %arg1: i32) -> (i32, i32) {
    %c0_i32 = arith.constant 0 : i32
    %c0_i32_0 = arith.constant 0 : i32
    %c0_i32_1 = arith.constant 0 : i32
    return %c0_i32, %c0_i32_0 : i32, i32
  }
  func.func @transform_5(%arg0: i32, %arg1: i32) -> (i32, i32, i32) {
    %c0_i32 = arith.constant 0 : i32
    %c0_i32_0 = arith.constant 0 : i32
    return %arg1, %arg0, %c0_i32 : i32, i32, i32
  }
}

</mosaic_0001>

<llo_original>
// kernel: rnn_forward_pallas.1
$region0: #{rnn_forward_pallas.1}
  #allocation0 [shape = 'u32[]', space=smem, size = 0x4, offset = 0x4, fixed_abs, tag = 'smem constant byte address 0x4 - core index']
  #allocation1 [shape = 'u32[144,128]{1,0:T(1,128)}', space=vmem, size = 0x12000, scoped, tag = 'internal scratch']
  #allocation2 [shape = 'f32[8,128]{1,0:T(8,128)}', space=vmem, size = 0x1000, scoped, tag = 'scratch operand']
  %s0 = inlined_call_operand.vmem [shape: f32[8,8,128], index: 0, kind: input, shape index: {}]
  %s1 = inlined_call_operand.vmem [shape: f32[8,128], index: 1, kind: input, shape index: {}]
  %s2 = inlined_call_operand.vmem [shape: f32[128,128], index: 2, kind: input, shape index: {}]
  %s3 = inlined_call_operand.vmem [shape: f32[128,128], index: 3, kind: input, shape index: {}]
  %s4 = inlined_call_operand.vmem [shape: f32[1,128], index: 4, kind: input, shape index: {}]
  %s5 = inlined_call_operand.vmem [shape: f32[8,8,128], index: 5, kind: output, shape index: {}]
  %s6 = sld [smem:[#allocation0]]
  $region34: #{rnn_forward_pallas.1} parent=0
    _
  %s8 = ssub.s32 1, %s6
  %s9 = scalar_select 0, %s8, %s6
  // Predicated region
  $region2: #{rnn_forward_pallas.1} parent=0 // pred_check
    _
  $region3: #{rnn_forward_pallas.1} parent=0 // pred_check_branch
    %11 = sbr.rel (0) target = $region5
  $region4: #{rnn_forward_pallas.1} parent=0 // pred_region
    _
  $region5: #{rnn_forward_pallas.1} parent=0 // pred_fallthru
    _
  // Predicated region
  $region6: #{rnn_forward_pallas.1} parent=0 // pred_check
    _
  $region7: #{rnn_forward_pallas.1} parent=0 // pred_check_branch
    %13 = sbr.rel (0) target = $region9
  $region8: #{rnn_forward_pallas.1} parent=0 // pred_region
    _
  $region9: #{rnn_forward_pallas.1} parent=0 // pred_fallthru
    _
  // Predicated region
  $region10: #{rnn_forward_pallas.1} parent=0 // pred_check
    _
  $region11: #{rnn_forward_pallas.1} parent=0 // pred_check_branch
    %15 = sbr.rel (0) target = $region13
  $region12: #{rnn_forward_pallas.1} parent=0 // pred_region
    _
  $region13: #{rnn_forward_pallas.1} parent=0 // pred_fallthru
    _
  // Predicated region
  $region14: #{rnn_forward_pallas.1} parent=0 // pred_check
    _
  $region15: #{rnn_forward_pallas.1} parent=0 // pred_check_branch
    %17 = sbr.rel (0) target = $region17
  $region16: #{rnn_forward_pallas.1} parent=0 // pred_region
    _
  $region17: #{rnn_forward_pallas.1} parent=0 // pred_fallthru
    _
  // Predicated region
  $region18: #{rnn_forward_pallas.1} parent=0 // pred_check
    _
  $region19: #{rnn_forward_pallas.1} parent=0 // pred_check_branch
    %19 = sbr.rel (0) target = $region21
  $region20: #{rnn_forward_pallas.1} parent=0 // pred_region
    _
  $region21: #{rnn_forward_pallas.1} parent=0 // pred_fallthru
    _
  %p20 = scmp.eq.s32.totalorder 0, 0
  // Predicated region
  $region22: #{rnn_forward_pallas.1} parent=0 // pred_check
    %p21 = pneg %p20
  $region23: #{rnn_forward_pallas.1} parent=0 // pred_check_branch
    %23 = sbr.rel (%p21) target = $region25
  $region24: #{rnn_forward_pallas.1} parent=0 // pred_region
    %v24 = vld [vmem:[%s1] sm:$0xff]
    %25 = vst [vmem:[#allocation2] sm:$0xff] %v24
  $region25: #{rnn_forward_pallas.1} parent=0 // pred_fallthru
    _
  %v26 = vld [vmem:[%s0] sm:$0xff]
  %v27 = vld [vmem:[%s0 + $0x8] sm:$0xff]
  %v28 = vld [vmem:[%s0 + $0x10] sm:$0xff]
  %v29 = vld [vmem:[%s0 + $0x18] sm:$0xff]
  %v30 = vld [vmem:[%s0 + $0x20] sm:$0xff]
  %v31 = vld [vmem:[%s0 + $0x28] sm:$0xff]
  %v32 = vld [vmem:[%s0 + $0x30] sm:$0xff]
  %v33 = vld [vmem:[%s0 + $0x38] sm:$0xff]
  %v34 = vld [vmem:[%s2] sm:$0xff]
  %v35 = vld [vmem:[%s2 + $0x8] sm:$0xff]
  %v36 = vld [vmem:[%s2 + $0x10] sm:$0xff]
  %v37 = vld [vmem:[%s2 + $0x18] sm:$0xff]
  %v38 = vld [vmem:[%s2 + $0x20] sm:$0xff]
  %v39 = vld [vmem:[%s2 + $0x28] sm:$0xff]
  %v40 = vld [vmem:[%s2 + $0x30] sm:$0xff]
  %v41 = vld [vmem:[%s2 + $0x38] sm:$0xff]
  %v42 = vld [vmem:[%s2 + $0x40] sm:$0xff]
  %v43 = vld [vmem:[%s2 + $0x48] sm:$0xff]
  %v44 = vld [vmem:[%s2 + $0x50] sm:$0xff]
  %v45 = vld [vmem:[%s2 + $0x58] sm:$0xff]
  %v46 = vld [vmem:[%s2 + $0x60] sm:$0xff]
  %v47 = vld [vmem:[%s2 + $0x68] sm:$0xff]
  %v48 = vld [vmem:[%s2 + $0x70] sm:$0xff]
  %v49 = vld [vmem:[%s2 + $0x78] sm:$0xff]
  %v50 = vld [vmem:[%s4] sm:$0x1]
  %v52 = vlaneseq
  %v53 = vshrl.u32 %v52, 7
  %v54 = vsub.s32 0, %v53
  %v55 = vrot.slane %v50, %v54
  %57 = vmatprep.subr.mxu0 0.0
  %58 = vmatpush1.msra.mxu0 %v34
  %59 = vmatprep.subr.mxu0 0.0
  %60 = vmatpush1.msra.mxu0 %v35
  %61 = vmatprep.subr.mxu0 0.0
  %62 = vmatpush1.msra.mxu0 %v36
  %63 = vmatprep.subr.mxu0 0.0
  %64 = vmatpush1.msra.mxu0 %v37
  %65 = vmatprep.subr.mxu0 0.0
  %66 = vmatpush1.msra.mxu0 %v38
  %67 = vmatprep.subr.mxu0 0.0
  %68 = vmatpush1.msra.mxu0 %v39
  %69 = vmatprep.subr.mxu0 0.0
  %70 = vmatpush1.msra.mxu0 %v40
  %71 = vmatprep.subr.mxu0 0.0
  %72 = vmatpush1.msra.mxu0 %v41
  %73 = vmatprep.subr.mxu0 0.0
  %74 = vmatpush1.msra.mxu0 %v42
  %75 = vmatprep.subr.mxu0 0.0
  %76 = vmatpush1.msra.mxu0 %v43
  %77 = vmatprep.subr.mxu0 0.0
  %78 = vmatpush1.msra.mxu0 %v44
  %79 = vmatprep.subr.mxu0 0.0
  %80 = vmatpush1.msra.mxu0 %v45
  %81 = vmatprep.subr.mxu0 0.0
  %82 = vmatpush1.msra.mxu0 %v46
  %83 = vmatprep.subr.mxu0 0.0
  %84 = vmatpush1.msra.mxu0 %v47
  %85 = vmatprep.subr.mxu0 0.0
  %86 = vmatpush1.msra.mxu0 %v48
  %87 = vmatprep.subr.mxu0 0.0
  %88 = vmatpush1.msra.mxu0 %v49
  %89 = vmatprep.subr.mxu0 0.0
  %90 = vmatpush1.msra.mxu0 0.0
  %91 = vmatprep.subr.mxu0 0.0
  %92 = vmatpush1.msra.mxu0 0.0
  %93 = vmatprep.subr.mxu0 0.0
  %94 = vmatpush1.msra.mxu0 0.0
  %95 = vmatprep.subr.mxu0 0.0
  %96 = vmatpush1.msra.mxu0 0.0
  %97 = vmatprep.subr.mxu0 0.0
  %98 = vmatpush1.msra.mxu0 0.0
  %99 = vmatprep.subr.mxu0 0.0
  %100 = vmatpush1.msra.mxu0 0.0
  %101 = vmatprep.subr.mxu0 0.0
  %102 = vmatpush1.msra.mxu0 0.0
  %103 = vmatprep.subr.mxu0 0.0
  %104 = vmatpush1.msra.mxu0 0.0
  %105 = vmatprep.subr.mxu0 0.0
  %106 = vmatpush1.msra.mxu0 0.0
  %107 = vmatprep.subr.mxu0 0.0
  %108 = vmatpush1.msra.mxu0 0.0
  %109 = vmatprep.subr.mxu0 0.0
  %110 = vmatpush1.msra.mxu0 0.0
  %111 = vmatprep.subr.mxu0 0.0
  %112 = vmatpush1.msra.mxu0 0.0
  %113 = vmatprep.subr.mxu0 0.0
  %114 = vmatpush1.msra.mxu0 0.0
  %115 = vmatprep.subr.mxu0 0.0
  %116 = vmatpush1.msra.mxu0 0.0
  %117 = vmatprep.subr.mxu0 0.0
  %118 = vmatpush1.msra.mxu0 0.0
  %119 = vmatprep.subr.mxu0 0.0
  %120 = vmatpush1.msra.mxu0 0.0
  %121 = vmatprep.mubr.f32.mxu0 0.0
  %122 = vmatmul.mubr.f32.gmra.mrb[0].mxu0 %v26
  %v123 = vpop.f32.mrb[0].mxu0
  %v124 = vadd.f32 %v55, %v123
  %v125 = vpop.f32.mrb[0].mxu0
  %126 = vmatprep.mubr.f32.mxu0 0.0
  %127 = vmatmul.mubr.f32.gmra.mrb[0].mxu0 %v27
  %v128 = vpop.f32.mrb[0].mxu0
  %v129 = vadd.f32 %v55, %v128
  %v130 = vpop.f32.mrb[0].mxu0
  %131 = vmatprep.mubr.f32.mxu0 0.0
  %132 = vmatmul.mubr.f32.gmra.mrb[0].mxu0 %v28
  %v133 = vpop.f32.mrb[0].mxu0
  %v134 = vadd.f32 %v55, %v133
  %v135 = vpop.f32.mrb[0].mxu0
  %136 = vmatprep.mubr.f32.mxu0 0.0
  %137 = vmatmul.mubr.f32.gmra.mrb[0].mxu0 %v29
  %v138 = vpop.f32.mrb[0].mxu0
  %v139 = vadd.f32 %v55, %v138
  %v140 = vpop.f32.mrb[0].mxu0
  %141 = vmatprep.mubr.f32.mxu0 0.0
  %142 = vmatmul.mubr.f32.gmra.mrb[0].mxu0 %v30
  %v143 = vpop.f32.mrb[0].mxu0
  %v144 = vadd.f32 %v55, %v143
  %v145 = vpop.f32.mrb[0].mxu0
  %146 = vmatprep.mubr.f32.mxu0 0.0
  %147 = vmatmul.mubr.f32.gmra.mrb[0].mxu0 %v31
  %v148 = vpop.f32.mrb[0].mxu0
  %v149 = vadd.f32 %v55, %v148
  %v150 = vpop.f32.mrb[0].mxu0
  %151 = vmatprep.mubr.f32.mxu0 0.0
  %152 = vmatmul.mubr.f32.gmra.mrb[0].mxu0 %v32
  %v153 = vpop.f32.mrb[0].mxu0
  %v154 = vadd.f32 %v55, %v153
  %v155 = vpop.f32.mrb[0].mxu0
  %156 = vmatprep.mubr.f32.mxu0 0.0
  %157 = vmatmul.mubr.f32.gmra.mrb[0].mxu0 %v33
  %v158 = vpop.f32.mrb[0].mxu0
  %v159 = vadd.f32 %v55, %v158
  %v160 = vpop.f32.mrb[0].mxu0
  %161 = vdwg.mxu0
  %162 = vst [vmem:[%s5] sm:$0xff] %v124
  %163 = vst [vmem:[%s5 + $0x8] sm:$0xff] %v129
  %164 = vst [vmem:[%s5 + $0x10] sm:$0xff] %v134
  %165 = vst [vmem:[%s5 + $0x18] sm:$0xff] %v139
  %166 = vst [vmem:[%s5 + $0x20] sm:$0xff] %v144
  %167 = vst [vmem:[%s5 + $0x28] sm:$0xff] %v149
  %168 = vst [vmem:[%s5 + $0x30] sm:$0xff] %v154
  %169 = vst [vmem:[%s5 + $0x38] sm:$0xff] %v159
  %v170 = vld [vmem:[%s3] sm:$0xff]
  %v171 = vld [vmem:[%s3 + $0x8] sm:$0xff]
  %v172 = vld [vmem:[%s3 + $0x10] sm:$0xff]
  %v173 = vld [vmem:[%s3 + $0x18] sm:$0xff]
  %v174 = vld [vmem:[%s3 + $0x20] sm:$0xff]
  %v175 = vld [vmem:[%s3 + $0x28] sm:$0xff]
  %v176 = vld [vmem:[%s3 + $0x30] sm:$0xff]
  %v177 = vld [vmem:[%s3 + $0x38] sm:$0xff]
  %v178 = vld [vmem:[%s3 + $0x40] sm:$0xff]
  %v179 = vld [vmem:[%s3 + $0x48] sm:$0xff]
  %v180 = vld [vmem:[%s3 + $0x50] sm:$0xff]
  %v181 = vld [vmem:[%s3 + $0x58] sm:$0xff]
  %v182 = vld [vmem:[%s3 + $0x60] sm:$0xff]
  %v183 = vld [vmem:[%s3 + $0x68] sm:$0xff]
  %v184 = vld [vmem:[%s3 + $0x70] sm:$0xff]
  %v185 = vld [vmem:[%s3 + $0x78] sm:$0xff]
  %v186 = vld [vmem:[#allocation2] sm:$0xff]
  %v187 = vld [vmem:[%s5] sm:$0xff]
  %188 = vmatprep.subr.mxu0 0.0
  %189 = vmatpush1.msra.mxu0 %v170
  %190 = vmatprep.subr.mxu0 0.0
  %191 = vmatpush1.msra.mxu0 %v171
  %192 = vmatprep.subr.mxu0 0.0
  %193 = vmatpush1.msra.mxu0 %v172
  %194 = vmatprep.subr.mxu0 0.0
  %195 = vmatpush1.msra.mxu0 %v173
  %196 = vmatprep.subr.mxu0 0.0
  %197 = vmatpush1.msra.mxu0 %v174
  %198 = vmatprep.subr.mxu0 0.0
  %199 = vmatpush1.msra.mxu0 %v175
  %200 = vmatprep.subr.mxu0 0.0
  %201 = vmatpush1.msra.mxu0 %v176
  %202 = vmatprep.subr.mxu0 0.0
  %203 = vmatpush1.msra.mxu0 %v177
  %204 = vmatprep.subr.mxu0 0.0
  %205 = vmatpush1.msra.mxu0 %v178
  %206 = vmatprep.subr.mxu0 0.0
  %207 = vmatpush1.msra.mxu0 %v179
  %208 = vmatprep.subr.mxu0 0.0
  %209 = vmatpush1.msra.mxu0 %v180
  %210 = vmatprep.subr.mxu0 0.0
  %211 = vmatpush1.msra.mxu0 %v181
  %212 = vmatprep.subr.mxu0 0.0
  %213 = vmatpush1.msra.mxu0 %v182
  %214 = vmatprep.subr.mxu0 0.0
  %215 = vmatpush1.msra.mxu0 %v183
  %216 = vmatprep.subr.mxu0 0.0
  %217 = vmatpush1.msra.mxu0 %v184
  %218 = vmatprep.subr.mxu0 0.0
  %219 = vmatpush1.msra.mxu0 %v185
  %220 = vmatprep.subr.mxu0 0.0
  %221 = vmatpush1.msra.mxu0 0.0
  %222 = vmatprep.subr.mxu0 0.0
  %223 = vmatpush1.msra.mxu0 0.0
  %224 = vmatprep.subr.mxu0 0.0
  %225 = vmatpush1.msra.mxu0 0.0
  %226 = vmatprep.subr.mxu0 0.0
  %227 = vmatpush1.msra.mxu0 0.0
  %228 = vmatprep.subr.mxu0 0.0
  %229 = vmatpush1.msra.mxu0 0.0
  %230 = vmatprep.subr.mxu0 0.0
  %231 = vmatpush1.msra.mxu0 0.0
  %232 = vmatprep.subr.mxu0 0.0
  %233 = vmatpush1.msra.mxu0 0.0
  %234 = vmatprep.subr.mxu0 0.0
  %235 = vmatpush1.msra.mxu0 0.0
  %236 = vmatprep.subr.mxu0 0.0
  %237 = vmatpush1.msra.mxu0 0.0
  %238 = vmatprep.subr.mxu0 0.0
  %239 = vmatpush1.msra.mxu0 0.0
  %240 = vmatprep.subr.mxu0 0.0
  %241 = vmatpush1.msra.mxu0 0.0
  %242 = vmatprep.subr.mxu0 0.0
  %243 = vmatpush1.msra.mxu0 0.0
  %244 = vmatprep.subr.mxu0 0.0
  %245 = vmatpush1.msra.mxu0 0.0
  %246 = vmatprep.subr.mxu0 0.0
  %247 = vmatpush1.msra.mxu0 0.0
  %248 = vmatprep.subr.mxu0 0.0
  %249 = vmatpush1.msra.mxu0 0.0
  %250 = vmatprep.subr.mxu0 0.0
  %251 = vmatpush1.msra.mxu0 0.0
  %252 = vmatprep.mubr.f32.mxu0 0.0
  %253 = vmatmul.mubr.f32.gmra.mrb[0].mxu0 %v186
  %v254 = vpop.f32.mrb[0].mxu0
  %v255 = vadd.f32 0.0, %v254
  %v256 = vpop.f32.mrb[0].mxu0
  %257 = vdwg.mxu0
  %v258 = vadd.f32 %v187, %v255
  %v259 = vtanh.pop %v258
  %260 = vst [vmem:[%s5] sm:$0xff] %v259
  %261 = vst [vmem:[#allocation2] sm:$0xff] %v259
  %v262 = vld [vmem:[#allocation2] sm:$0xff]
  %s263 = scalar_lea.vmem %s5, 8
  %v264 = vld [vmem:[%s263] sm:$0xff]
  %265 = vmatprep.subr.mxu0 0.0
  %266 = vmatpush1.msra.mxu0 %v170
  %267 = vmatprep.subr.mxu0 0.0
  %268 = vmatpush1.msra.mxu0 %v171
  %269 = vmatprep.subr.mxu0 0.0
  %270 = vmatpush1.msra.mxu0 %v172
  %271 = vmatprep.subr.mxu0 0.0
  %272 = vmatpush1.msra.mxu0 %v173
  %273 = vmatprep.subr.mxu0 0.0
  %274 = vmatpush1.msra.mxu0 %v174
  %275 = vmatprep.subr.mxu0 0.0
  %276 = vmatpush1.msra.mxu0 %v175
  %277 = vmatprep.subr.mxu0 0.0
  %278 = vmatpush1.msra.mxu0 %v176
  %279 = vmatprep.subr.mxu0 0.0
  %280 = vmatpush1.msra.mxu0 %v177
  %281 = vmatprep.subr.mxu0 0.0
  %282 = vmatpush1.msra.mxu0 %v178
  %283 = vmatprep.subr.mxu0 0.0
  %284 = vmatpush1.msra.mxu0 %v179
  %285 = vmatprep.subr.mxu0 0.0
  %286 = vmatpush1.msra.mxu0 %v180
  %287 = vmatprep.subr.mxu0 0.0
  %288 = vmatpush1.msra.mxu0 %v181
  %289 = vmatprep.subr.mxu0 0.0
  %290 = vmatpush1.msra.mxu0 %v182
  %291 = vmatprep.subr.mxu0 0.0
  %292 = vmatpush1.msra.mxu0 %v183
  %293 = vmatprep.subr.mxu0 0.0
  %294 = vmatpush1.msra.mxu0 %v184
  %295 = vmatprep.subr.mxu0 0.0
  %296 = vmatpush1.msra.mxu0 %v185
  %297 = vmatprep.subr.mxu0 0.0
  %298 = vmatpush1.msra.mxu0 0.0
  %299 = vmatprep.subr.mxu0 0.0
  %300 = vmatpush1.msra.mxu0 0.0
  %301 = vmatprep.subr.mxu0 0.0
  %302 = vmatpush1.msra.mxu0 0.0
  %303 = vmatprep.subr.mxu0 0.0
  %304 = vmatpush1.msra.mxu0 0.0
  %305 = vmatprep.subr.mxu0 0.0
  %306 = vmatpush1.msra.mxu0 0.0
  %307 = vmatprep.subr.mxu0 0.0
  %308 = vmatpush1.msra.mxu0 0.0
  %309 = vmatprep.subr.mxu0 0.0
  %310 = vmatpush1.msra.mxu0 0.0
  %311 = vmatprep.subr.mxu0 0.0
  %312 = vmatpush1.msra.mxu0 0.0
  %313 = vmatprep.subr.mxu0 0.0
  %314 = vmatpush1.msra.mxu0 0.0
  %315 = vmatprep.subr.mxu0 0.0
  %316 = vmatpush1.msra.mxu0 0.0
  %317 = vmatprep.subr.mxu0 0.0
  %318 = vmatpush1.msra.mxu0 0.0
  %319 = vmatprep.subr.mxu0 0.0
  %320 = vmatpush1.msra.mxu0 0.0
  %321 = vmatprep.subr.mxu0 0.0
  %322 = vmatpush1.msra.mxu0 0.0
  %323 = vmatprep.subr.mxu0 0.0
  %324 = vmatpush1.msra.mxu0 0.0
  %325 = vmatprep.subr.mxu0 0.0
  %326 = vmatpush1.msra.mxu0 0.0
  %327 = vmatprep.subr.mxu0 0.0
  %328 = vmatpush1.msra.mxu0 0.0
  %329 = vmatprep.mubr.f32.mxu0 0.0
  %330 = vmatmul.mubr.f32.gmra.mrb[0].mxu0 %v262
  %v331 = vpop.f32.mrb[0].mxu0
  %v332 = vadd.f32 0.0, %v331
  %v333 = vpop.f32.mrb[0].mxu0
  %334 = vdwg.mxu0
  %v335 = vadd.f32 %v264, %v332
  %v336 = vtanh.pop %v335
  %337 = vst [vmem:[%s263] sm:$0xff] %v336
  %338 = vst [vmem:[#allocation2] sm:$0xff] %v336
  %v339 = vld [vmem:[#allocation2] sm:$0xff]
  %s340 = scalar_lea.vmem %s5, 16
  %v341 = vld [vmem:[%s340] sm:$0xff]
  %342 = vmatprep.subr.mxu0 0.0
  %343 = vmatpush1.msra.mxu0 %v170
  %344 = vmatprep.subr.mxu0 0.0
  %345 = vmatpush1.msra.mxu0 %v171
  %346 = vmatprep.subr.mxu0 0.0
  %347 = vmatpush1.msra.mxu0 %v172
  %348 = vmatprep.subr.mxu0 0.0
  %349 = vmatpush1.msra.mxu0 %v173
  %350 = vmatprep.subr.mxu0 0.0
  %351 = vmatpush1.msra.mxu0 %v174
  %352 = vmatprep.subr.mxu0 0.0
  %353 = vmatpush1.msra.mxu0 %v175
  %354 = vmatprep.subr.mxu0 0.0
  %355 = vmatpush1.msra.mxu0 %v176
  %356 = vmatprep.subr.mxu0 0.0
  %357 = vmatpush1.msra.mxu0 %v177
  %358 = vmatprep.subr.mxu0 0.0
  %359 = vmatpush1.msra.mxu0 %v178
  %360 = vmatprep.subr.mxu0 0.0
  %361 = vmatpush1.msra.mxu0 %v179
  %362 = vmatprep.subr.mxu0 0.0
  %363 = vmatpush1.msra.mxu0 %v180
  %364 = vmatprep.subr.mxu0 0.0
  %365 = vmatpush1.msra.mxu0 %v181
  %366 = vmatprep.subr.mxu0 0.0
  %367 = vmatpush1.msra.mxu0 %v182
  %368 = vmatprep.subr.mxu0 0.0
  %369 = vmatpush1.msra.mxu0 %v183
  %370 = vmatprep.subr.mxu0 0.0
  %371 = vmatpush1.msra.mxu0 %v184
  %372 = vmatprep.subr.mxu0 0.0
  %373 = vmatpush1.msra.mxu0 %v185
  %374 = vmatprep.subr.mxu0 0.0
  %375 = vmatpush1.msra.mxu0 0.0
  %376 = vmatprep.subr.mxu0 0.0
  %377 = vmatpush1.msra.mxu0 0.0
  %378 = vmatprep.subr.mxu0 0.0
  %379 = vmatpush1.msra.mxu0 0.0
  %380 = vmatprep.subr.mxu0 0.0
  %381 = vmatpush1.msra.mxu0 0.0
  %382 = vmatprep.subr.mxu0 0.0
  %383 = vmatpush1.msra.mxu0 0.0
  %384 = vmatprep.subr.mxu0 0.0
  %385 = vmatpush1.msra.mxu0 0.0
  %386 = vmatprep.subr.mxu0 0.0
  %387 = vmatpush1.msra.mxu0 0.0
  %388 = vmatprep.subr.mxu0 0.0
  %389 = vmatpush1.msra.mxu0 0.0
  %390 = vmatprep.subr.mxu0 0.0
  %391 = vmatpush1.msra.mxu0 0.0
  %392 = vmatprep.subr.mxu0 0.0
  %393 = vmatpush1.msra.mxu0 0.0
  %394 = vmatprep.subr.mxu0 0.0
  %395 = vmatpush1.msra.mxu0 0.0
  %396 = vmatprep.subr.mxu0 0.0
  %397 = vmatpush1.msra.mxu0 0.0
  %398 = vmatprep.subr.mxu0 0.0
  %399 = vmatpush1.msra.mxu0 0.0
  %400 = vmatprep.subr.mxu0 0.0
  %401 = vmatpush1.msra.mxu0 0.0
  %402 = vmatprep.subr.mxu0 0.0
  %403 = vmatpush1.msra.mxu0 0.0
  %404 = vmatprep.subr.mxu0 0.0
  %405 = vmatpush1.msra.mxu0 0.0
  %406 = vmatprep.mubr.f32.mxu0 0.0
  %407 = vmatmul.mubr.f32.gmra.mrb[0].mxu0 %v339
  %v408 = vpop.f32.mrb[0].mxu0
  %v409 = vadd.f32 0.0, %v408
  %v410 = vpop.f32.mrb[0].mxu0
  %411 = vdwg.mxu0
  %v412 = vadd.f32 %v341, %v409
  %v413 = vtanh.pop %v412
  %414 = vst [vmem:[%s340] sm:$0xff] %v413
  %415 = vst [vmem:[#allocation2] sm:$0xff] %v413
  %v416 = vld [vmem:[#allocation2] sm:$0xff]
  %s417 = scalar_lea.vmem %s5, 24
  %v418 = vld [vmem:[%s417] sm:$0xff]
  %419 = vmatprep.subr.mxu0 0.0
  %420 = vmatpush1.msra.mxu0 %v170
  %421 = vmatprep.subr.mxu0 0.0
  %422 = vmatpush1.msra.mxu0 %v171
  %423 = vmatprep.subr.mxu0 0.0
  %424 = vmatpush1.msra.mxu0 %v172
  %425 = vmatprep.subr.mxu0 0.0
  %426 = vmatpush1.msra.mxu0 %v173
  %427 = vmatprep.subr.mxu0 0.0
  %428 = vmatpush1.msra.mxu0 %v174
  %429 = vmatprep.subr.mxu0 0.0
  %430 = vmatpush1.msra.mxu0 %v175
  %431 = vmatprep.subr.mxu0 0.0
  %432 = vmatpush1.msra.mxu0 %v176
  %433 = vmatprep.subr.mxu0 0.0
  %434 = vmatpush1.msra.mxu0 %v177
  %435 = vmatprep.subr.mxu0 0.0
  %436 = vmatpush1.msra.mxu0 %v178
  %437 = vmatprep.subr.mxu0 0.0
  %438 = vmatpush1.msra.mxu0 %v179
  %439 = vmatprep.subr.mxu0 0.0
  %440 = vmatpush1.msra.mxu0 %v180
  %441 = vmatprep.subr.mxu0 0.0
  %442 = vmatpush1.msra.mxu0 %v181
  %443 = vmatprep.subr.mxu0 0.0
  %444 = vmatpush1.msra.mxu0 %v182
  %445 = vmatprep.subr.mxu0 0.0
  %446 = vmatpush1.msra.mxu0 %v183
  %447 = vmatprep.subr.mxu0 0.0
  %448 = vmatpush1.msra.mxu0 %v184
  %449 = vmatprep.subr.mxu0 0.0
  %450 = vmatpush1.msra.mxu0 %v185
  %451 = vmatprep.subr.mxu0 0.0
  %452 = vmatpush1.msra.mxu0 0.0
  %453 = vmatprep.subr.mxu0 0.0
  %454 = vmatpush1.msra.mxu0 0.0
  %455 = vmatprep.subr.mxu0 0.0
  %456 = vmatpush1.msra.mxu0 0.0
  %457 = vmatprep.subr.mxu0 0.0
  %458 = vmatpush1.msra.mxu0 0.0
  %459 = vmatprep.subr.mxu0 0.0
  %460 = vmatpush1.msra.mxu0 0.0
  %461 = vmatprep.subr.mxu0 0.0
  %462 = vmatpush1.msra.mxu0 0.0
  %463 = vmatprep.subr.mxu0 0.0
  %464 = vmatpush1.msra.mxu0 0.0
  %465 = vmatprep.subr.mxu0 0.0
  %466 = vmatpush1.msra.mxu0 0.0
  %467 = vmatprep.subr.mxu0 0.0
  %468 = vmatpush1.msra.mxu0 0.0
  %469 = vmatprep.subr.mxu0 0.0
  %470 = vmatpush1.msra.mxu0 0.0
  %471 = vmatprep.subr.mxu0 0.0
  %472 = vmatpush1.msra.mxu0 0.0
  %473 = vmatprep.subr.mxu0 0.0
  %474 = vmatpush1.msra.mxu0 0.0
  %475 = vmatprep.subr.mxu0 0.0
  %476 = vmatpush1.msra.mxu0 0.0
  %477 = vmatprep.subr.mxu0 0.0
  %478 = vmatpush1.msra.mxu0 0.0
  %479 = vmatprep.subr.mxu0 0.0
  %480 = vmatpush1.msra.mxu0 0.0
  %481 = vmatprep.subr.mxu0 0.0
  %482 = vmatpush1.msra.mxu0 0.0
  %483 = vmatprep.mubr.f32.mxu0 0.0
  %484 = vmatmul.mubr.f32.gmra.mrb[0].mxu0 %v416
  %v485 = vpop.f32.mrb[0].mxu0
  %v486 = vadd.f32 0.0, %v485
  %v487 = vpop.f32.mrb[0].mxu0
  %488 = vdwg.mxu0
  %v489 = vadd.f32 %v418, %v486
  %v490 = vtanh.pop %v489
  %491 = vst [vmem:[%s417] sm:$0xff] %v490
  %492 = vst [vmem:[#allocation2] sm:$0xff] %v490
  %v493 = vld [vmem:[#allocation2] sm:$0xff]
  %s494 = scalar_lea.vmem %s5, 32
  %v495 = vld [vmem:[%s494] sm:$0xff]
  %496 = vmatprep.subr.mxu0 0.0
  %497 = vmatpush1.msra.mxu0 %v170
  %498 = vmatprep.subr.mxu0 0.0
  %499 = vmatpush1.msra.mxu0 %v171
  %500 = vmatprep.subr.mxu0 0.0
  %501 = vmatpush1.msra.mxu0 %v172
  %502 = vmatprep.subr.mxu0 0.0
  %503 = vmatpush1.msra.mxu0 %v173
  %504 = vmatprep.subr.mxu0 0.0
  %505 = vmatpush1.msra.mxu0 %v174
  %506 = vmatprep.subr.mxu0 0.0
  %507 = vmatpush1.msra.mxu0 %v175
  %508 = vmatprep.subr.mxu0 0.0
  %509 = vmatpush1.msra.mxu0 %v176
  %510 = vmatprep.subr.mxu0 0.0
  %511 = vmatpush1.msra.mxu0 %v177
  %512 = vmatprep.subr.mxu0 0.0
  %513 = vmatpush1.msra.mxu0 %v178
  %514 = vmatprep.subr.mxu0 0.0
  %515 = vmatpush1.msra.mxu0 %v179
  %516 = vmatprep.subr.mxu0 0.0
  %517 = vmatpush1.msra.mxu0 %v180
  %518 = vmatprep.subr.mxu0 0.0
  %519 = vmatpush1.msra.mxu0 %v181
  %520 = vmatprep.subr.mxu0 0.0
  %521 = vmatpush1.msra.mxu0 %v182
  %522 = vmatprep.subr.mxu0 0.0
  %523 = vmatpush1.msra.mxu0 %v183
  %524 = vmatprep.subr.mxu0 0.0
  %525 = vmatpush1.msra.mxu0 %v184
  %526 = vmatprep.subr.mxu0 0.0
  %527 = vmatpush1.msra.mxu0 %v185
  %528 = vmatprep.subr.mxu0 0.0
  %529 = vmatpush1.msra.mxu0 0.0
  %530 = vmatprep.subr.mxu0 0.0
  %531 = vmatpush1.msra.mxu0 0.0
  %532 = vmatprep.subr.mxu0 0.0
  %533 = vmatpush1.msra.mxu0 0.0
  %534 = vmatprep.subr.mxu0 0.0
  %535 = vmatpush1.msra.mxu0 0.0
  %536 = vmatprep.subr.mxu0 0.0
  %537 = vmatpush1.msra.mxu0 0.0
  %538 = vmatprep.subr.mxu0 0.0
  %539 = vmatpush1.msra.mxu0 0.0
  %540 = vmatprep.subr.mxu0 0.0
  %541 = vmatpush1.msra.mxu0 0.0
  %542 = vmatprep.subr.mxu0 0.0
  %543 = vmatpush1.msra.mxu0 0.0
  %544 = vmatprep.subr.mxu0 0.0
  %545 = vmatpush1.msra.mxu0 0.0
  %546 = vmatprep.subr.mxu0 0.0
  %547 = vmatpush1.msra.mxu0 0.0
  %548 = vmatprep.subr.mxu0 0.0
  %549 = vmatpush1.msra.mxu0 0.0
  %550 = vmatprep.subr.mxu0 0.0
  %551 = vmatpush1.msra.mxu0 0.0
  %552 = vmatprep.subr.mxu0 0.0
  %553 = vmatpush1.msra.mxu0 0.0
  %554 = vmatprep.subr.mxu0 0.0
  %555 = vmatpush1.msra.mxu0 0.0
  %556 = vmatprep.subr.mxu0 0.0
  %557 = vmatpush1.msra.mxu0 0.0
  %558 = vmatprep.subr.mxu0 0.0
  %559 = vmatpush1.msra.mxu0 0.0
  %560 = vmatprep.mubr.f32.mxu0 0.0
  %561 = vmatmul.mubr.f32.gmra.mrb[0].mxu0 %v493
  %v562 = vpop.f32.mrb[0].mxu0
  %v563 = vadd.f32 0.0, %v562
  %v564 = vpop.f32.mrb[0].mxu0
  %565 = vdwg.mxu0
  %v566 = vadd.f32 %v495, %v563
  %v567 = vtanh.pop %v566
  %568 = vst [vmem:[%s494] sm:$0xff] %v567
  %569 = vst [vmem:[#allocation2] sm:$0xff] %v567
  %v570 = vld [vmem:[#allocation2] sm:$0xff]
  %s571 = scalar_lea.vmem %s5, 40
  %v572 = vld [vmem:[%s571] sm:$0xff]
  %573 = vmatprep.subr.mxu0 0.0
  %574 = vmatpush1.msra.mxu0 %v170
  %575 = vmatprep.subr.mxu0 0.0
  %576 = vmatpush1.msra.mxu0 %v171
  %577 = vmatprep.subr.mxu0 0.0
  %578 = vmatpush1.msra.mxu0 %v172
  %579 = vmatprep.subr.mxu0 0.0
  %580 = vmatpush1.msra.mxu0 %v173
  %581 = vmatprep.subr.mxu0 0.0
  %582 = vmatpush1.msra.mxu0 %v174
  %583 = vmatprep.subr.mxu0 0.0
  %584 = vmatpush1.msra.mxu0 %v175
  %585 = vmatprep.subr.mxu0 0.0
  %586 = vmatpush1.msra.mxu0 %v176
  %587 = vmatprep.subr.mxu0 0.0
  %588 = vmatpush1.msra.mxu0 %v177
  %589 = vmatprep.subr.mxu0 0.0
  %590 = vmatpush1.msra.mxu0 %v178
  %591 = vmatprep.subr.mxu0 0.0
  %592 = vmatpush1.msra.mxu0 %v179
  %593 = vmatprep.subr.mxu0 0.0
  %594 = vmatpush1.msra.mxu0 %v180
  %595 = vmatprep.subr.mxu0 0.0
  %596 = vmatpush1.msra.mxu0 %v181
  %597 = vmatprep.subr.mxu0 0.0
  %598 = vmatpush1.msra.mxu0 %v182
  %599 = vmatprep.subr.mxu0 0.0
  %600 = vmatpush1.msra.mxu0 %v183
  %601 = vmatprep.subr.mxu0 0.0
  %602 = vmatpush1.msra.mxu0 %v184
  %603 = vmatprep.subr.mxu0 0.0
  %604 = vmatpush1.msra.mxu0 %v185
  %605 = vmatprep.subr.mxu0 0.0
  %606 = vmatpush1.msra.mxu0 0.0
  %607 = vmatprep.subr.mxu0 0.0
  %608 = vmatpush1.msra.mxu0 0.0
  %609 = vmatprep.subr.mxu0 0.0
  %610 = vmatpush1.msra.mxu0 0.0
  %611 = vmatprep.subr.mxu0 0.0
  %612 = vmatpush1.msra.mxu0 0.0
  %613 = vmatprep.subr.mxu0 0.0
  %614 = vmatpush1.msra.mxu0 0.0
  %615 = vmatprep.subr.mxu0 0.0
  %616 = vmatpush1.msra.mxu0 0.0
  %617 = vmatprep.subr.mxu0 0.0
  %618 = vmatpush1.msra.mxu0 0.0
  %619 = vmatprep.subr.mxu0 0.0
  %620 = vmatpush1.msra.mxu0 0.0
  %621 = vmatprep.subr.mxu0 0.0
  %622 = vmatpush1.msra.mxu0 0.0
  %623 = vmatprep.subr.mxu0 0.0
  %624 = vmatpush1.msra.mxu0 0.0
  %625 = vmatprep.subr.mxu0 0.0
  %626 = vmatpush1.msra.mxu0 0.0
  %627 = vmatprep.subr.mxu0 0.0
  %628 = vmatpush1.msra.mxu0 0.0
  %629 = vmatprep.subr.mxu0 0.0
  %630 = vmatpush1.msra.mxu0 0.0
  %631 = vmatprep.subr.mxu0 0.0
  %632 = vmatpush1.msra.mxu0 0.0
  %633 = vmatprep.subr.mxu0 0.0
  %634 = vmatpush1.msra.mxu0 0.0
  %635 = vmatprep.subr.mxu0 0.0
  %636 = vmatpush1.msra.mxu0 0.0
  %637 = vmatprep.mubr.f32.mxu0 0.0
  %638 = vmatmul.mubr.f32.gmra.mrb[0].mxu0 %v570
  %v639 = vpop.f32.mrb[0].mxu0
  %v640 = vadd.f32 0.0, %v639
  %v641 = vpop.f32.mrb[0].mxu0
  %642 = vdwg.mxu0
  %v643 = vadd.f32 %v572, %v640
  %v644 = vtanh.pop %v643
  %645 = vst [vmem:[%s571] sm:$0xff] %v644
  %646 = vst [vmem:[#allocation2] sm:$0xff] %v644
  %v647 = vld [vmem:[#allocation2] sm:$0xff]
  %s648 = scalar_lea.vmem %s5, 48
  %v649 = vld [vmem:[%s648] sm:$0xff]
  %650 = vmatprep.subr.mxu0 0.0
  %651 = vmatpush1.msra.mxu0 %v170
  %652 = vmatprep.subr.mxu0 0.0
  %653 = vmatpush1.msra.mxu0 %v171
  %654 = vmatprep.subr.mxu0 0.0
  %655 = vmatpush1.msra.mxu0 %v172
  %656 = vmatprep.subr.mxu0 0.0
  %657 = vmatpush1.msra.mxu0 %v173
  %658 = vmatprep.subr.mxu0 0.0
  %659 = vmatpush1.msra.mxu0 %v174
  %660 = vmatprep.subr.mxu0 0.0
  %661 = vmatpush1.msra.mxu0 %v175
  %662 = vmatprep.subr.mxu0 0.0
  %663 = vmatpush1.msra.mxu0 %v176
  %664 = vmatprep.subr.mxu0 0.0
  %665 = vmatpush1.msra.mxu0 %v177
  %666 = vmatprep.subr.mxu0 0.0
  %667 = vmatpush1.msra.mxu0 %v178
  %668 = vmatprep.subr.mxu0 0.0
  %669 = vmatpush1.msra.mxu0 %v179
  %670 = vmatprep.subr.mxu0 0.0
  %671 = vmatpush1.msra.mxu0 %v180
  %672 = vmatprep.subr.mxu0 0.0
  %673 = vmatpush1.msra.mxu0 %v181
  %674 = vmatprep.subr.mxu0 0.0
  %675 = vmatpush1.msra.mxu0 %v182
  %676 = vmatprep.subr.mxu0 0.0
  %677 = vmatpush1.msra.mxu0 %v183
  %678 = vmatprep.subr.mxu0 0.0
  %679 = vmatpush1.msra.mxu0 %v184
  %680 = vmatprep.subr.mxu0 0.0
  %681 = vmatpush1.msra.mxu0 %v185
  %682 = vmatprep.subr.mxu0 0.0
  %683 = vmatpush1.msra.mxu0 0.0
  %684 = vmatprep.subr.mxu0 0.0
  %685 = vmatpush1.msra.mxu0 0.0
  %686 = vmatprep.subr.mxu0 0.0
  %687 = vmatpush1.msra.mxu0 0.0
  %688 = vmatprep.subr.mxu0 0.0
  %689 = vmatpush1.msra.mxu0 0.0
  %690 = vmatprep.subr.mxu0 0.0
  %691 = vmatpush1.msra.mxu0 0.0
  %692 = vmatprep.subr.mxu0 0.0
  %693 = vmatpush1.msra.mxu0 0.0
  %694 = vmatprep.subr.mxu0 0.0
  %695 = vmatpush1.msra.mxu0 0.0
  %696 = vmatprep.subr.mxu0 0.0
  %697 = vmatpush1.msra.mxu0 0.0
  %698 = vmatprep.subr.mxu0 0.0
  %699 = vmatpush1.msra.mxu0 0.0
  %700 = vmatprep.subr.mxu0 0.0
  %701 = vmatpush1.msra.mxu0 0.0
  %702 = vmatprep.subr.mxu0 0.0
  %703 = vmatpush1.msra.mxu0 0.0
  %704 = vmatprep.subr.mxu0 0.0
  %705 = vmatpush1.msra.mxu0 0.0
  %706 = vmatprep.subr.mxu0 0.0
  %707 = vmatpush1.msra.mxu0 0.0
  %708 = vmatprep.subr.mxu0 0.0
  %709 = vmatpush1.msra.mxu0 0.0
  %710 = vmatprep.subr.mxu0 0.0
  %711 = vmatpush1.msra.mxu0 0.0
  %712 = vmatprep.subr.mxu0 0.0
  %713 = vmatpush1.msra.mxu0 0.0
  %714 = vmatprep.mubr.f32.mxu0 0.0
  %715 = vmatmul.mubr.f32.gmra.mrb[0].mxu0 %v647
  %v716 = vpop.f32.mrb[0].mxu0
  %v717 = vadd.f32 0.0, %v716
  %v718 = vpop.f32.mrb[0].mxu0
  %719 = vdwg.mxu0
  %v720 = vadd.f32 %v649, %v717
  %v721 = vtanh.pop %v720
  %722 = vst [vmem:[%s648] sm:$0xff] %v721
  %723 = vst [vmem:[#allocation2] sm:$0xff] %v721
  %v724 = vld [vmem:[#allocation2] sm:$0xff]
  %s725 = scalar_lea.vmem %s5, 56
  %v726 = vld [vmem:[%s725] sm:$0xff]
  %727 = vmatprep.subr.mxu0 0.0
  %728 = vmatpush1.msra.mxu0 %v170
  %729 = vmatprep.subr.mxu0 0.0
  %730 = vmatpush1.msra.mxu0 %v171
  %731 = vmatprep.subr.mxu0 0.0
  %732 = vmatpush1.msra.mxu0 %v172
  %733 = vmatprep.subr.mxu0 0.0
  %734 = vmatpush1.msra.mxu0 %v173
  %735 = vmatprep.subr.mxu0 0.0
  %736 = vmatpush1.msra.mxu0 %v174
  %737 = vmatprep.subr.mxu0 0.0
  %738 = vmatpush1.msra.mxu0 %v175
  %739 = vmatprep.subr.mxu0 0.0
  %740 = vmatpush1.msra.mxu0 %v176
  %741 = vmatprep.subr.mxu0 0.0
  %742 = vmatpush1.msra.mxu0 %v177
  %743 = vmatprep.subr.mxu0 0.0
  %744 = vmatpush1.msra.mxu0 %v178
  %745 = vmatprep.subr.mxu0 0.0
  %746 = vmatpush1.msra.mxu0 %v179
  %747 = vmatprep.subr.mxu0 0.0
  %748 = vmatpush1.msra.mxu0 %v180
  %749 = vmatprep.subr.mxu0 0.0
  %750 = vmatpush1.msra.mxu0 %v181
  %751 = vmatprep.subr.mxu0 0.0
  %752 = vmatpush1.msra.mxu0 %v182
  %753 = vmatprep.subr.mxu0 0.0
  %754 = vmatpush1.msra.mxu0 %v183
  %755 = vmatprep.subr.mxu0 0.0
  %756 = vmatpush1.msra.mxu0 %v184
  %757 = vmatprep.subr.mxu0 0.0
  %758 = vmatpush1.msra.mxu0 %v185
  %759 = vmatprep.subr.mxu0 0.0
  %760 = vmatpush1.msra.mxu0 0.0
  %761 = vmatprep.subr.mxu0 0.0
  %762 = vmatpush1.msra.mxu0 0.0
  %763 = vmatprep.subr.mxu0 0.0
  %764 = vmatpush1.msra.mxu0 0.0
  %765 = vmatprep.subr.mxu0 0.0
  %766 = vmatpush1.msra.mxu0 0.0
  %767 = vmatprep.subr.mxu0 0.0
  %768 = vmatpush1.msra.mxu0 0.0
  %769 = vmatprep.subr.mxu0 0.0
  %770 = vmatpush1.msra.mxu0 0.0
  %771 = vmatprep.subr.mxu0 0.0
  %772 = vmatpush1.msra.mxu0 0.0
  %773 = vmatprep.subr.mxu0 0.0
  %774 = vmatpush1.msra.mxu0 0.0
  %775 = vmatprep.subr.mxu0 0.0
  %776 = vmatpush1.msra.mxu0 0.0
  %777 = vmatprep.subr.mxu0 0.0
  %778 = vmatpush1.msra.mxu0 0.0
  %779 = vmatprep.subr.mxu0 0.0
  %780 = vmatpush1.msra.mxu0 0.0
  %781 = vmatprep.subr.mxu0 0.0
  %782 = vmatpush1.msra.mxu0 0.0
  %783 = vmatprep.subr.mxu0 0.0
  %784 = vmatpush1.msra.mxu0 0.0
  %785 = vmatprep.subr.mxu0 0.0
  %786 = vmatpush1.msra.mxu0 0.0
  %787 = vmatprep.subr.mxu0 0.0
  %788 = vmatpush1.msra.mxu0 0.0
  %789 = vmatprep.subr.mxu0 0.0
  %790 = vmatpush1.msra.mxu0 0.0
  %791 = vmatprep.mubr.f32.mxu0 0.0
  %792 = vmatmul.mubr.f32.gmra.mrb[0].mxu0 %v724
  %v793 = vpop.f32.mrb[0].mxu0
  %v794 = vadd.f32 0.0, %v793
  %v795 = vpop.f32.mrb[0].mxu0
  %796 = vdwg.mxu0
  %v797 = vadd.f32 %v726, %v794
  %v798 = vtanh.pop %v797
  %799 = vst [vmem:[%s725] sm:$0xff] %v798
  %800 = vst [vmem:[#allocation2] sm:$0xff] %v798
  // Predicated region
  $region26: #{rnn_forward_pallas.1} parent=0 // pred_check
    _
  $region27: #{rnn_forward_pallas.1} parent=0 // pred_check_branch
    %802 = sbr.rel (0) target = $region29
  $region28: #{rnn_forward_pallas.1} parent=0 // pred_region
    _
  $region29: #{rnn_forward_pallas.1} parent=0 // pred_fallthru
    _
  // Predicated region
  $region30: #{rnn_forward_pallas.1} parent=0 // pred_check
    _
  $region31: #{rnn_forward_pallas.1} parent=0 // pred_check_branch
    %804 = sbr.rel (0) target = $region33
  $region32: #{rnn_forward_pallas.1} parent=0 // pred_region
    _
  $region33: #{rnn_forward_pallas.1} parent=0 // pred_fallthru
    _

</llo_original>
